<compile_context>
chip_gen: v7x
topology: tpu7x:2x2x1
jax: 0.10.0
libtpu: 0.0.40
codegen_flags: <defaults>
</compile_context>

<pallas_src>
import functools

import numpy as np
import jax
import jax.numpy as jnp
from jax import lax
from jax.experimental import pallas as pl
from jax.experimental.pallas import tpu as pltpu


# ---------------------------------------------------------------------------
# Fused kernel: agent attention + depthwise 3x3 conv on one (Gt, 8, N) block
# ---------------------------------------------------------------------------
def _fused_kernel(x_ref, adiag_ref, ck_ref, vdiag_ref, bias_ref, mw_ref,
                  segmask_ref, out_ref, *, C, W, N):
    x = x_ref[...]                                        # (Gt, 8, N) f32

    # ---------------- agent attention (2nd softmax == identity) -------------
    pooled = jnp.max(x, axis=2, keepdims=True)            # (Gt, 8, 1) adaptive max pool

    # u = scale * (wk^T wq @ pooled + wk^T bq): one (within-vreg) sublane roll
    # + MAD per diagonal of the (C,C) matrix, all images of the block at once.
    u = ck_ref[...] + adiag_ref[C - 1] * pooled           # d == 0 diagonal
    for j, d in enumerate(range(-(C - 1), C)):
        if d == 0:
            continue
        u = u + adiag_ref[j] * pltpu.roll(pooled, shift=d % 8, axis=1)

    prod = u * x                                          # (Gt, 8, N)

    # Per-image channel sum of `prod`, broadcast back to every channel row of
    # that image: log-tree of sublane rolls + a row mask (exact, adds zeros).
    s8 = prod
    k = 1
    while k < C:
        s8 = s8 + pltpu.roll(s8, shift=k, axis=1)
        k *= 2
    s8 = s8 * segmask_ref[...]                            # keep rows r % C == C-1
    k = 1
    while k < C:
        s8 = s8 + pltpu.roll(s8, shift=(8 - k) % 8, axis=1)
        k *= 2
    # s8[g, r, n] now holds the attention score of row r's image at position n.

    # batched softmax over the spatial (lane) axis
    m8 = jnp.max(s8, axis=2, keepdims=True)               # (Gt, 8, 1)
    e8 = jnp.exp(s8 - m8)                                 # EUP
    z8 = jnp.sum(e8, axis=2, keepdims=True)
    inv = pl.reciprocal(z8, approx=True)                  # EUP slot (otherwise idle)
    inv = inv * (2.0 - z8 * inv)                          # one Newton step -> f32 exact
    y = jnp.sum(x * e8, axis=2, keepdims=True) * inv      # (Gt, 8, 1); a1 never stored

    # pv = wv @ y + (bv + b_dw + agent_bias1 + agent_bias2), per-diagonal MADs
    pv = bias_ref[...] + vdiag_ref[C - 1] * y
    for j, d in enumerate(range(-(C - 1), C)):
        if d == 0:
            continue
        pv = pv + vdiag_ref[j] * pltpu.roll(y, shift=d % 8, axis=1)

    # ---------------- 3x3 depthwise conv: 1 lane-roll + 1 MAD per tap --------
    acc = x * mw_ref[4]                                   # center tap (mask == 1)
    for dh in (-1, 0, 1):
        for dw in (-1, 0, 1):
            if dh == 0 and dw == 0:
                continue
            t = (dh + 1) * 3 + (dw + 1)
            d = dh * W + dw
            xs = pltpu.roll(x, shift=(-d) % N, axis=2)    # XLU lane rotation
            acc = acc + xs * mw_ref[t]                    # border mask folded in weight

    out_ref[...] = (acc + pv).astype(out_ref.dtype)


def _pick_gt(G, N, block_bytes):
    """Largest group-count per block <= block_bytes, preferring an even >=2 grid."""
    cap = max(1, block_bytes // (8 * N * 4))
    best = None
    for d in range(1, G + 1):
        if G % d or d > cap:
            continue
        steps = G // d
        if steps >= 2 and steps % 2 == 0:                 # keep both v7x cores busy
            best = d
    if best is None:
        for d in range(1, G + 1):
            if G % d == 0 and d <= cap:
                best = d
    return best if best is not None else 1


# ---------------------------------------------------------------------------
# Wrapper
# ---------------------------------------------------------------------------
def agent_attention_forward(FM, params, block_bytes=1 << 20):
    """FM: (B, C, H, W) float32 (NCHW, like the PyTorch module)."""
    B, C, H, W = FM.shape
    N = H * W
    assert C in (1, 2, 4, 8), "packed sublane layout needs C to divide 8"
    # TODO(synk): generalize the 8-row packing for channel counts not dividing 8.
    reps = 8 // C                                         # images per 8-sublane group
    scale = 1.0 / float(C) ** 0.5
    f32 = jnp.float32

    wq = params["wq"].astype(f32); bq = params["bq"].astype(f32)
    wk = params["wk"].astype(f32)
    wv = params["wv"].astype(f32); bv = params["bv"].astype(f32)
    w_dw9 = params["w_dw"].reshape(C, 9).astype(f32)
    b_dw = params["b_dw"].astype(f32)
    ab12 = (jnp.asarray(params["agent_bias1"], f32).reshape(-1)
            + jnp.asarray(params["agent_bias2"], f32).reshape(-1))

    # Fold projections once (tiny host-side math).
    akq = (wk.T @ wq) * scale                             # (C, C)
    ck_ch = (wk.T @ bq) * scale                           # (C,)
    bias_ch = bv + b_dw + ab12                            # (C,)

    c_of_row = np.tile(np.arange(C), reps)                # channel of each of 8 rows

    def diag_rows(M):                                     # (C, C) -> (2C-1, 8, 1)
        outs = []
        for d in range(-(C - 1), C):
            src = c_of_row - d
            valid = (src >= 0) & (src < C)
            coeff = jnp.where(jnp.asarray(valid),
                              M[c_of_row, np.clip(src, 0, C - 1)], 0.0)
            outs.append(coeff)
        return jnp.stack(outs).reshape(2 * C - 1, 8, 1).astype(f32)

    adiag = diag_rows(akq)
    vdiag = diag_rows(wv)
    ck_row = ck_ch[c_of_row].reshape(8, 1).astype(f32)
    bias_row = bias_ch[c_of_row].reshape(8, 1).astype(f32)
    segmask = jnp.asarray((np.arange(8) % C) == (C - 1), f32).reshape(8, 1)

    # 3x3 taps with border masks folded into the weights: mw[t] = w_dw[c,t]*mask_t[n]
    hh = np.arange(H); ww = np.arange(W)
    taps = []
    for dh in (-1, 0, 1):
        for dw in (-1, 0, 1):
            row_ok = (hh + dh >= 0) & (hh + dh < H)
            col_ok = (ww + dw >= 0) & (ww + dw < W)
            mask = jnp.asarray((row_ok[:, None] & col_ok[None, :]).reshape(N), f32)
            t = (dh + 1) * 3 + (dw + 1)
            w_row = w_dw9[:, t][c_of_row]                 # (8,)
            taps.append(w_row[:, None] * mask[None, :])   # (8, N)
    assert len(taps) == 9
    mw = jnp.stack(taps).astype(f32)                      # (9, 8, N)

    # Pack activations: rows ordered (b, c); 8 rows (= 8//C images) per group.
    fm = FM.reshape(B, C, N).astype(f32)                  # free view
    B_pad = -(-B // reps) * reps
    if B_pad != B:                                        # zero images; sliced off below
        fm = jnp.pad(fm, ((0, B_pad - B), (0, 0), (0, 0)))
    G = (B_pad * C) // 8
    fm = fm.reshape(G, 8, N)                              # free (contiguous) reshape

    Gt = _pick_gt(G, N, block_bytes)
    grid = (G // Gt,)

    out = pl.pallas_call(
        functools.partial(_fused_kernel, C=C, W=W, N=N),
        out_shape=jax.ShapeDtypeStruct((G, 8, N), f32),
        grid_spec=pltpu.PrefetchScalarGridSpec(
            num_scalar_prefetch=0,
            grid=grid,
            in_specs=[
                pl.BlockSpec((Gt, 8, N), lambda g: (g, 0, 0)),         # activations
                pl.BlockSpec((2 * C - 1, 8, 1), lambda g: (0, 0, 0)),  # akq diagonals
                pl.BlockSpec((8, 1), lambda g: (0, 0)),                # wk^T bq (scaled)
                pl.BlockSpec((2 * C - 1, 8, 1), lambda g: (0, 0, 0)),  # wv diagonals
                pl.BlockSpec((8, 1), lambda g: (0, 0)),                # folded biases
                pl.BlockSpec((9, 8, N), lambda g: (0, 0, 0)),          # masked conv taps
                pl.BlockSpec((8, 1), lambda g: (0, 0)),                # segment-end rows
            ],
            out_specs=pl.BlockSpec((Gt, 8, N), lambda g: (g, 0, 0)),   # lane-dense store
        ),
        compiler_params=pltpu.CompilerParams(
            dimension_semantics=("parallel",),             # megacore / v7x dual-TC
        ),
    )(fm, adiag, ck_row, vdiag, bias_row, mw, segmask)

    out = out.reshape(B_pad, C, H, W)
    return out[:B] if B_pad != B else out


# ---------------------------------------------------------------------------
# Pure-JAX reference (mirrors the full PyTorch forward, incl. attention-2)
# ---------------------------------------------------------------------------
def reference_forward(FM, params):
    B, C, H, W = FM.shape
    fm_flat = jnp.transpose(FM.reshape(B, C, H * W), (0, 2, 1))
    pooled = jnp.max(FM.reshape(B, C, -1), axis=-1)
    q = pooled @ params["wq"].T + params["bq"]
    k = fm_flat @ params["wk"].T + params["bk"]
    attn1 = jax.nn.softmax(jnp.einsum("bnc,bc->bn", k, q) / (C ** 0.5), axis=1)
    v = fm_flat @ params["wv"].T + params["bv"]
    PV = jnp.einsum("bn,bnc->bc", attn1, v) + params["agent_bias1"]
    pooled_k = pooled @ params["wk"].T + params["bk"]
    q2 = fm_flat @ params["wq"].T + params["bq"]
    attn2 = jax.nn.softmax(jnp.einsum("bnc,bc->bn", q2, pooled_k) / (C ** 0.5), axis=1)
    PV_prime = jnp.einsum("bn,bc->bc", attn2, PV) + params["agent_bias2"]
    conv = lax.conv_general_dilated(
        FM, params["w_dw"], window_strides=(1, 1), padding="SAME",
        feature_group_count=C, dimension_numbers=("NCHW", "OIHW", "NCHW"))
    conv = conv + params["b_dw"][None, :, None, None]
    return conv + PV_prime[:, :, None, None]


if __name__ == "__main__":
    B, C, H, W = 2, 4, 16, 16
    key = jax.random.PRNGKey(0)
    keys = jax.random.split(key, 10)
    FM = jax.random.normal(keys[0], (B, C, H, W), jnp.float32)

    # deterministic synthetic parameters (shapes per AgentAttention.__init__)
    params = {
        "wq": jax.random.normal(keys[1], (C, C), jnp.float32) * 0.2,
        "bq": jax.random.normal(keys[2], (C,), jnp.float32) * 0.1,
        "wk": jax.random.normal(keys[3], (C, C), jnp.float32) * 0.2,
        "bk": jax.random.normal(keys[4], (C,), jnp.float32) * 0.1,
        "wv": jax.random.normal(keys[5], (C, C), jnp.float32) * 0.2,
        "bv": jax.random.normal(keys[6], (C,), jnp.float32) * 0.1,
        "agent_bias1": jnp.float32(0.05),    # torch init is zeros(1); nonzero to exercise the add
        "agent_bias2": jnp.float32(-0.03),
        "w_dw": jax.random.normal(keys[7], (C, 1, 3, 3), jnp.float32) * 0.2,  # depthwise
        "b_dw": jax.random.normal(keys[8], (C,), jnp.float32) * 0.1,
    }

    out = agent_attention_forward(FM, params)
    out = jax.block_until_ready(out)

    ref = reference_forward(FM, params)
    assert out.shape == (B, C, H, W)
    assert jnp.allclose(out, ref, atol=1e-4, rtol=1e-4), "mismatch vs reference"
    print("KERNEL_OK")
</pallas_src>

<mosaic_0001>
module attributes {stable_mosaic.version = 11 : i64} {
  func.func @_fused_kernel(%arg0: i32, %arg1: memref<1x8x256xf32, #tpu.memory_space<vmem>>, %arg2: memref<7x8x1xf32, #tpu.memory_space<vmem>>, %arg3: memref<8x1xf32, #tpu.memory_space<vmem>>, %arg4: memref<7x8x1xf32, #tpu.memory_space<vmem>>, %arg5: memref<8x1xf32, #tpu.memory_space<vmem>>, %arg6: memref<9x8x256xf32, #tpu.memory_space<vmem>>, %arg7: memref<8x1xf32, #tpu.memory_space<vmem>>, %arg8: memref<1x8x256xf32, #tpu.memory_space<vmem>>) attributes {dimension_semantics = [#tpu.dimension_semantics<parallel>], iteration_bounds = array<i64: 1>, scalar_prefetch = 0 : i64, scratch_operands = 0 : i64, tpu.core_type = #tpu.core_type<tc>, window_params = [{transform_indices = @transform_0, window_bounds = array<i64: 1, 8, 256>}, {pipeline_mode = #tpu.pipeline_mode<synchronous>, transform_indices = @transform_1, window_bounds = array<i64: 7, 8, 1>}, {pipeline_mode = #tpu.pipeline_mode<synchronous>, transform_indices = @transform_2, window_bounds = array<i64: 8, 1>}, {pipeline_mode = #tpu.pipeline_mode<synchronous>, transform_indices = @transform_3, window_bounds = array<i64: 7, 8, 1>}, {pipeline_mode = #tpu.pipeline_mode<synchronous>, transform_indices = @transform_4, window_bounds = array<i64: 8, 1>}, {pipeline_mode = #tpu.pipeline_mode<synchronous>, transform_indices = @transform_5, window_bounds = array<i64: 9, 8, 256>}, {pipeline_mode = #tpu.pipeline_mode<synchronous>, transform_indices = @transform_6, window_bounds = array<i64: 8, 1>}, {transform_indices = @transform_7, window_bounds = array<i64: 1, 8, 256>}]} {
    %c0 = arith.constant 0 : index
    %c0_0 = arith.constant 0 : index
    %c0_1 = arith.constant 0 : index
    %0 = vector.load %arg1[%c0, %c0_0, %c0_1] : memref<1x8x256xf32, #tpu.memory_space<vmem>>, vector<1x8x256xf32>
    %cst = arith.constant dense<0xFF800000> : vector<1x8xf32>
    %1 = vector.multi_reduction <maximumf>, %0, %cst [2] : vector<1x8x256xf32> to vector<1x8xf32>
    %2 = vector.shape_cast %1 : vector<1x8xf32> to vector<1x8x1xf32>
    %c0_2 = arith.constant 0 : index
    %c0_3 = arith.constant 0 : index
    %3 = vector.load %arg3[%c0_2, %c0_3] : memref<8x1xf32, #tpu.memory_space<vmem>>, vector<8x1xf32>
    %c3 = arith.constant 3 : index
    %c0_4 = arith.constant 0 : index
    %c0_5 = arith.constant 0 : index
    %4 = vector.load %arg2[%c3, %c0_4, %c0_5] : memref<7x8x1xf32, #tpu.memory_space<vmem>>, vector<1x8x1xf32>
    %5 = vector.shape_cast %4 : vector<1x8x1xf32> to vector<8x1xf32>
    %6 = vector.shape_cast %5 : vector<8x1xf32> to vector<1x8x1xf32>
    %7 = arith.mulf %6, %2 : vector<1x8x1xf32>
    %8 = vector.shape_cast %3 : vector<8x1xf32> to vector<1x8x1xf32>
    %9 = arith.addf %8, %7 : vector<1x8x1xf32>
    %c0_6 = arith.constant 0 : index
    %c0_7 = arith.constant 0 : index
    %c0_8 = arith.constant 0 : index
    %10 = vector.load %arg2[%c0_6, %c0_7, %c0_8] : memref<7x8x1xf32, #tpu.memory_space<vmem>>, vector<1x8x1xf32>
    %11 = vector.shape_cast %10 : vector<1x8x1xf32> to vector<8x1xf32>
    %c5_i32 = arith.constant 5 : i32
    %12 = tpu.dynamic_rotate %2 by %c5_i32 dim 1 : vector<1x8x1xf32>, i32 -> vector<1x8x1xf32>
    %13 = vector.shape_cast %11 : vector<8x1xf32> to vector<1x8x1xf32>
    %14 = arith.mulf %13, %12 : vector<1x8x1xf32>
    %15 = arith.addf %9, %14 : vector<1x8x1xf32>
    %c1 = arith.constant 1 : index
    %c0_9 = arith.constant 0 : index
    %c0_10 = arith.constant 0 : index
    %16 = vector.load %arg2[%c1, %c0_9, %c0_10] : memref<7x8x1xf32, #tpu.memory_space<vmem>>, vector<1x8x1xf32>
    %17 = vector.shape_cast %16 : vector<1x8x1xf32> to vector<8x1xf32>
    %c6_i32 = arith.constant 6 : i32
    %18 = tpu.dynamic_rotate %2 by %c6_i32 dim 1 : vector<1x8x1xf32>, i32 -> vector<1x8x1xf32>
    %19 = vector.shape_cast %17 : vector<8x1xf32> to vector<1x8x1xf32>
    %20 = arith.mulf %19, %18 : vector<1x8x1xf32>
    %21 = arith.addf %15, %20 : vector<1x8x1xf32>
    %c2 = arith.constant 2 : index
    %c0_11 = arith.constant 0 : index
    %c0_12 = arith.constant 0 : index
    %22 = vector.load %arg2[%c2, %c0_11, %c0_12] : memref<7x8x1xf32, #tpu.memory_space<vmem>>, vector<1x8x1xf32>
    %23 = vector.shape_cast %22 : vector<1x8x1xf32> to vector<8x1xf32>
    %c7_i32 = arith.constant 7 : i32
    %24 = tpu.dynamic_rotate %2 by %c7_i32 dim 1 : vector<1x8x1xf32>, i32 -> vector<1x8x1xf32>
    %25 = vector.shape_cast %23 : vector<8x1xf32> to vector<1x8x1xf32>
    %26 = arith.mulf %25, %24 : vector<1x8x1xf32>
    %27 = arith.addf %21, %26 : vector<1x8x1xf32>
    %c4 = arith.constant 4 : index
    %c0_13 = arith.constant 0 : index
    %c0_14 = arith.constant 0 : index
    %28 = vector.load %arg2[%c4, %c0_13, %c0_14] : memref<7x8x1xf32, #tpu.memory_space<vmem>>, vector<1x8x1xf32>
    %29 = vector.shape_cast %28 : vector<1x8x1xf32> to vector<8x1xf32>
    %c1_i32 = arith.constant 1 : i32
    %30 = tpu.dynamic_rotate %2 by %c1_i32 dim 1 : vector<1x8x1xf32>, i32 -> vector<1x8x1xf32>
    %31 = vector.shape_cast %29 : vector<8x1xf32> to vector<1x8x1xf32>
    %32 = arith.mulf %31, %30 : vector<1x8x1xf32>
    %33 = arith.addf %27, %32 : vector<1x8x1xf32>
    %c5 = arith.constant 5 : index
    %c0_15 = arith.constant 0 : index
    %c0_16 = arith.constant 0 : index
    %34 = vector.load %arg2[%c5, %c0_15, %c0_16] : memref<7x8x1xf32, #tpu.memory_space<vmem>>, vector<1x8x1xf32>
    %35 = vector.shape_cast %34 : vector<1x8x1xf32> to vector<8x1xf32>
    %c2_i32 = arith.constant 2 : i32
    %36 = tpu.dynamic_rotate %2 by %c2_i32 dim 1 : vector<1x8x1xf32>, i32 -> vector<1x8x1xf32>
    %37 = vector.shape_cast %35 : vector<8x1xf32> to vector<1x8x1xf32>
    %38 = arith.mulf %37, %36 : vector<1x8x1xf32>
    %39 = arith.addf %33, %38 : vector<1x8x1xf32>
    %c6 = arith.constant 6 : index
    %c0_17 = arith.constant 0 : index
    %c0_18 = arith.constant 0 : index
    %40 = vector.load %arg2[%c6, %c0_17, %c0_18] : memref<7x8x1xf32, #tpu.memory_space<vmem>>, vector<1x8x1xf32>
    %41 = vector.shape_cast %40 : vector<1x8x1xf32> to vector<8x1xf32>
    %c3_i32 = arith.constant 3 : i32
    %42 = tpu.dynamic_rotate %2 by %c3_i32 dim 1 : vector<1x8x1xf32>, i32 -> vector<1x8x1xf32>
    %43 = vector.shape_cast %41 : vector<8x1xf32> to vector<1x8x1xf32>
    %44 = arith.mulf %43, %42 : vector<1x8x1xf32>
    %45 = arith.addf %39, %44 : vector<1x8x1xf32>
    %46 = vector.broadcast %45 : vector<1x8x1xf32> to vector<1x8x256xf32>
    %47 = arith.mulf %46, %0 : vector<1x8x256xf32>
    %c1_i32_19 = arith.constant 1 : i32
    %48 = tpu.dynamic_rotate %47 by %c1_i32_19 dim 1 : vector<1x8x256xf32>, i32 -> vector<1x8x256xf32>
    %49 = arith.addf %47, %48 : vector<1x8x256xf32>
    %c2_i32_20 = arith.constant 2 : i32
    %50 = tpu.dynamic_rotate %49 by %c2_i32_20 dim 1 : vector<1x8x256xf32>, i32 -> vector<1x8x256xf32>
    %51 = arith.addf %49, %50 : vector<1x8x256xf32>
    %c0_21 = arith.constant 0 : index
    %c0_22 = arith.constant 0 : index
    %52 = vector.load %arg7[%c0_21, %c0_22] : memref<8x1xf32, #tpu.memory_space<vmem>>, vector<8x1xf32>
    %53 = vector.shape_cast %52 : vector<8x1xf32> to vector<1x8x1xf32>
    %54 = vector.broadcast %53 : vector<1x8x1xf32> to vector<1x8x256xf32>
    %55 = arith.mulf %51, %54 : vector<1x8x256xf32>
    %c7_i32_23 = arith.constant 7 : i32
    %56 = tpu.dynamic_rotate %55 by %c7_i32_23 dim 1 : vector<1x8x256xf32>, i32 -> vector<1x8x256xf32>
    %57 = arith.addf %55, %56 : vector<1x8x256xf32>
    %c6_i32_24 = arith.constant 6 : i32
    %58 = tpu.dynamic_rotate %57 by %c6_i32_24 dim 1 : vector<1x8x256xf32>, i32 -> vector<1x8x256xf32>
    %59 = arith.addf %57, %58 : vector<1x8x256xf32>
    %cst_25 = arith.constant dense<0xFF800000> : vector<1x8xf32>
    %60 = vector.multi_reduction <maximumf>, %59, %cst_25 [2] : vector<1x8x256xf32> to vector<1x8xf32>
    %61 = vector.shape_cast %60 : vector<1x8xf32> to vector<1x8x1xf32>
    %62 = vector.broadcast %61 : vector<1x8x1xf32> to vector<1x8x256xf32>
    %63 = arith.subf %59, %62 : vector<1x8x256xf32>
    %64 = math.exp %63 : vector<1x8x256xf32>
    %cst_26 = arith.constant dense<0.000000e+00> : vector<1x8xf32>
    %65 = vector.multi_reduction <add>, %64, %cst_26 [2] : vector<1x8x256xf32> to vector<1x8xf32>
    %66 = vector.shape_cast %65 : vector<1x8xf32> to vector<1x8x1xf32>
    %67 = tpu.reciprocal %66 {approx = true} : vector<1x8x1xf32> -> vector<1x8x1xf32>
    %68 = arith.mulf %66, %67 : vector<1x8x1xf32>
    %cst_27 = arith.constant 2.000000e+00 : f32
    %69 = vector.broadcast %cst_27 : f32 to vector<1x8x1xf32>
    %70 = arith.subf %69, %68 : vector<1x8x1xf32>
    %71 = arith.mulf %67, %70 : vector<1x8x1xf32>
    %72 = arith.mulf %0, %64 : vector<1x8x256xf32>
    %cst_28 = arith.constant dense<0.000000e+00> : vector<1x8xf32>
    %73 = vector.multi_reduction <add>, %72, %cst_28 [2] : vector<1x8x256xf32> to vector<1x8xf32>
    %74 = vector.shape_cast %73 : vector<1x8xf32> to vector<1x8x1xf32>
    %75 = arith.mulf %74, %71 : vector<1x8x1xf32>
    %c0_29 = arith.constant 0 : index
    %c0_30 = arith.constant 0 : index
    %76 = vector.load %arg5[%c0_29, %c0_30] : memref<8x1xf32, #tpu.memory_space<vmem>>, vector<8x1xf32>
    %c3_31 = arith.constant 3 : index
    %c0_32 = arith.constant 0 : index
    %c0_33 = arith.constant 0 : index
    %77 = vector.load %arg4[%c3_31, %c0_32, %c0_33] : memref<7x8x1xf32, #tpu.memory_space<vmem>>, vector<1x8x1xf32>
    %78 = vector.shape_cast %77 : vector<1x8x1xf32> to vector<8x1xf32>
    %79 = vector.shape_cast %78 : vector<8x1xf32> to vector<1x8x1xf32>
    %80 = arith.mulf %79, %75 : vector<1x8x1xf32>
    %81 = vector.shape_cast %76 : vector<8x1xf32> to vector<1x8x1xf32>
    %82 = arith.addf %81, %80 : vector<1x8x1xf32>
    %c0_34 = arith.constant 0 : index
    %c0_35 = arith.constant 0 : index
    %c0_36 = arith.constant 0 : index
    %83 = vector.load %arg4[%c0_34, %c0_35, %c0_36] : memref<7x8x1xf32, #tpu.memory_space<vmem>>, vector<1x8x1xf32>
    %84 = vector.shape_cast %83 : vector<1x8x1xf32> to vector<8x1xf32>
    %c5_i32_37 = arith.constant 5 : i32
    %85 = tpu.dynamic_rotate %75 by %c5_i32_37 dim 1 : vector<1x8x1xf32>, i32 -> vector<1x8x1xf32>
    %86 = vector.shape_cast %84 : vector<8x1xf32> to vector<1x8x1xf32>
    %87 = arith.mulf %86, %85 : vector<1x8x1xf32>
    %88 = arith.addf %82, %87 : vector<1x8x1xf32>
    %c1_38 = arith.constant 1 : index
    %c0_39 = arith.constant 0 : index
    %c0_40 = arith.constant 0 : index
    %89 = vector.load %arg4[%c1_38, %c0_39, %c0_40] : memref<7x8x1xf32, #tpu.memory_space<vmem>>, vector<1x8x1xf32>
    %90 = vector.shape_cast %89 : vector<1x8x1xf32> to vector<8x1xf32>
    %c6_i32_41 = arith.constant 6 : i32
    %91 = tpu.dynamic_rotate %75 by %c6_i32_41 dim 1 : vector<1x8x1xf32>, i32 -> vector<1x8x1xf32>
    %92 = vector.shape_cast %90 : vector<8x1xf32> to vector<1x8x1xf32>
    %93 = arith.mulf %92, %91 : vector<1x8x1xf32>
    %94 = arith.addf %88, %93 : vector<1x8x1xf32>
    %c2_42 = arith.constant 2 : index
    %c0_43 = arith.constant 0 : index
    %c0_44 = arith.constant 0 : index
    %95 = vector.load %arg4[%c2_42, %c0_43, %c0_44] : memref<7x8x1xf32, #tpu.memory_space<vmem>>, vector<1x8x1xf32>
    %96 = vector.shape_cast %95 : vector<1x8x1xf32> to vector<8x1xf32>
    %c7_i32_45 = arith.constant 7 : i32
    %97 = tpu.dynamic_rotate %75 by %c7_i32_45 dim 1 : vector<1x8x1xf32>, i32 -> vector<1x8x1xf32>
    %98 = vector.shape_cast %96 : vector<8x1xf32> to vector<1x8x1xf32>
    %99 = arith.mulf %98, %97 : vector<1x8x1xf32>
    %100 = arith.addf %94, %99 : vector<1x8x1xf32>
    %c4_46 = arith.constant 4 : index
    %c0_47 = arith.constant 0 : index
    %c0_48 = arith.constant 0 : index
    %101 = vector.load %arg4[%c4_46, %c0_47, %c0_48] : memref<7x8x1xf32, #tpu.memory_space<vmem>>, vector<1x8x1xf32>
    %102 = vector.shape_cast %101 : vector<1x8x1xf32> to vector<8x1xf32>
    %c1_i32_49 = arith.constant 1 : i32
    %103 = tpu.dynamic_rotate %75 by %c1_i32_49 dim 1 : vector<1x8x1xf32>, i32 -> vector<1x8x1xf32>
    %104 = vector.shape_cast %102 : vector<8x1xf32> to vector<1x8x1xf32>
    %105 = arith.mulf %104, %103 : vector<1x8x1xf32>
    %106 = arith.addf %100, %105 : vector<1x8x1xf32>
    %c5_50 = arith.constant 5 : index
    %c0_51 = arith.constant 0 : index
    %c0_52 = arith.constant 0 : index
    %107 = vector.load %arg4[%c5_50, %c0_51, %c0_52] : memref<7x8x1xf32, #tpu.memory_space<vmem>>, vector<1x8x1xf32>
    %108 = vector.shape_cast %107 : vector<1x8x1xf32> to vector<8x1xf32>
    %c2_i32_53 = arith.constant 2 : i32
    %109 = tpu.dynamic_rotate %75 by %c2_i32_53 dim 1 : vector<1x8x1xf32>, i32 -> vector<1x8x1xf32>
    %110 = vector.shape_cast %108 : vector<8x1xf32> to vector<1x8x1xf32>
    %111 = arith.mulf %110, %109 : vector<1x8x1xf32>
    %112 = arith.addf %106, %111 : vector<1x8x1xf32>
    %c6_54 = arith.constant 6 : index
    %c0_55 = arith.constant 0 : index
    %c0_56 = arith.constant 0 : index
    %113 = vector.load %arg4[%c6_54, %c0_55, %c0_56] : memref<7x8x1xf32, #tpu.memory_space<vmem>>, vector<1x8x1xf32>
    %114 = vector.shape_cast %113 : vector<1x8x1xf32> to vector<8x1xf32>
    %c3_i32_57 = arith.constant 3 : i32
    %115 = tpu.dynamic_rotate %75 by %c3_i32_57 dim 1 : vector<1x8x1xf32>, i32 -> vector<1x8x1xf32>
    %116 = vector.shape_cast %114 : vector<8x1xf32> to vector<1x8x1xf32>
    %117 = arith.mulf %116, %115 : vector<1x8x1xf32>
    %118 = arith.addf %112, %117 : vector<1x8x1xf32>
    %c4_58 = arith.constant 4 : index
    %c0_59 = arith.constant 0 : index
    %c0_60 = arith.constant 0 : index
    %119 = vector.load %arg6[%c4_58, %c0_59, %c0_60] : memref<9x8x256xf32, #tpu.memory_space<vmem>>, vector<1x8x256xf32>
    %120 = vector.shape_cast %119 : vector<1x8x256xf32> to vector<8x256xf32>
    %121 = vector.shape_cast %120 : vector<8x256xf32> to vector<1x8x256xf32>
    %122 = arith.mulf %0, %121 : vector<1x8x256xf32>
    %c17_i32 = arith.constant 17 : i32
    %123 = tpu.dynamic_rotate %0 by %c17_i32 dim 2 : vector<1x8x256xf32>, i32 -> vector<1x8x256xf32>
    %c0_61 = arith.constant 0 : index
    %c0_62 = arith.constant 0 : index
    %c0_63 = arith.constant 0 : index
    %124 = vector.load %arg6[%c0_61, %c0_62, %c0_63] : memref<9x8x256xf32, #tpu.memory_space<vmem>>, vector<1x8x256xf32>
    %125 = vector.shape_cast %124 : vector<1x8x256xf32> to vector<8x256xf32>
    %126 = vector.shape_cast %125 : vector<8x256xf32> to vector<1x8x256xf32>
    %127 = arith.mulf %123, %126 : vector<1x8x256xf32>
    %128 = arith.addf %122, %127 : vector<1x8x256xf32>
    %c16_i32 = arith.constant 16 : i32
    %129 = tpu.dynamic_rotate %0 by %c16_i32 dim 2 : vector<1x8x256xf32>, i32 -> vector<1x8x256xf32>
    %c1_64 = arith.constant 1 : index
    %c0_65 = arith.constant 0 : index
    %c0_66 = arith.constant 0 : index
    %130 = vector.load %arg6[%c1_64, %c0_65, %c0_66] : memref<9x8x256xf32, #tpu.memory_space<vmem>>, vector<1x8x256xf32>
    %131 = vector.shape_cast %130 : vector<1x8x256xf32> to vector<8x256xf32>
    %132 = vector.shape_cast %131 : vector<8x256xf32> to vector<1x8x256xf32>
    %133 = arith.mulf %129, %132 : vector<1x8x256xf32>
    %134 = arith.addf %128, %133 : vector<1x8x256xf32>
    %c15_i32 = arith.constant 15 : i32
    %135 = tpu.dynamic_rotate %0 by %c15_i32 dim 2 : vector<1x8x256xf32>, i32 -> vector<1x8x256xf32>
    %c2_67 = arith.constant 2 : index
    %c0_68 = arith.constant 0 : index
    %c0_69 = arith.constant 0 : index
    %136 = vector.load %arg6[%c2_67, %c0_68, %c0_69] : memref<9x8x256xf32, #tpu.memory_space<vmem>>, vector<1x8x256xf32>
    %137 = vector.shape_cast %136 : vector<1x8x256xf32> to vector<8x256xf32>
    %138 = vector.shape_cast %137 : vector<8x256xf32> to vector<1x8x256xf32>
    %139 = arith.mulf %135, %138 : vector<1x8x256xf32>
    %140 = arith.addf %134, %139 : vector<1x8x256xf32>
    %c1_i32_70 = arith.constant 1 : i32
    %141 = tpu.dynamic_rotate %0 by %c1_i32_70 dim 2 : vector<1x8x256xf32>, i32 -> vector<1x8x256xf32>
    %c3_71 = arith.constant 3 : index
    %c0_72 = arith.constant 0 : index
    %c0_73 = arith.constant 0 : index
    %142 = vector.load %arg6[%c3_71, %c0_72, %c0_73] : memref<9x8x256xf32, #tpu.memory_space<vmem>>, vector<1x8x256xf32>
    %143 = vector.shape_cast %142 : vector<1x8x256xf32> to vector<8x256xf32>
    %144 = vector.shape_cast %143 : vector<8x256xf32> to vector<1x8x256xf32>
    %145 = arith.mulf %141, %144 : vector<1x8x256xf32>
    %146 = arith.addf %140, %145 : vector<1x8x256xf32>
    %c255_i32 = arith.constant 255 : i32
    %147 = tpu.dynamic_rotate %0 by %c255_i32 dim 2 : vector<1x8x256xf32>, i32 -> vector<1x8x256xf32>
    %c5_74 = arith.constant 5 : index
    %c0_75 = arith.constant 0 : index
    %c0_76 = arith.constant 0 : index
    %148 = vector.load %arg6[%c5_74, %c0_75, %c0_76] : memref<9x8x256xf32, #tpu.memory_space<vmem>>, vector<1x8x256xf32>
    %149 = vector.shape_cast %148 : vector<1x8x256xf32> to vector<8x256xf32>
    %150 = vector.shape_cast %149 : vector<8x256xf32> to vector<1x8x256xf32>
    %151 = arith.mulf %147, %150 : vector<1x8x256xf32>
    %152 = arith.addf %146, %151 : vector<1x8x256xf32>
    %c241_i32 = arith.constant 241 : i32
    %153 = tpu.dynamic_rotate %0 by %c241_i32 dim 2 : vector<1x8x256xf32>, i32 -> vector<1x8x256xf32>
    %c6_77 = arith.constant 6 : index
    %c0_78 = arith.constant 0 : index
    %c0_79 = arith.constant 0 : index
    %154 = vector.load %arg6[%c6_77, %c0_78, %c0_79] : memref<9x8x256xf32, #tpu.memory_space<vmem>>, vector<1x8x256xf32>
    %155 = vector.shape_cast %154 : vector<1x8x256xf32> to vector<8x256xf32>
    %156 = vector.shape_cast %155 : vector<8x256xf32> to vector<1x8x256xf32>
    %157 = arith.mulf %153, %156 : vector<1x8x256xf32>
    %158 = arith.addf %152, %157 : vector<1x8x256xf32>
    %c240_i32 = arith.constant 240 : i32
    %159 = tpu.dynamic_rotate %0 by %c240_i32 dim 2 : vector<1x8x256xf32>, i32 -> vector<1x8x256xf32>
    %c7 = arith.constant 7 : index
    %c0_80 = arith.constant 0 : index
    %c0_81 = arith.constant 0 : index
    %160 = vector.load %arg6[%c7, %c0_80, %c0_81] : memref<9x8x256xf32, #tpu.memory_space<vmem>>, vector<1x8x256xf32>
    %161 = vector.shape_cast %160 : vector<1x8x256xf32> to vector<8x256xf32>
    %162 = vector.shape_cast %161 : vector<8x256xf32> to vector<1x8x256xf32>
    %163 = arith.mulf %159, %162 : vector<1x8x256xf32>
    %164 = arith.addf %158, %163 : vector<1x8x256xf32>
    %c239_i32 = arith.constant 239 : i32
    %165 = tpu.dynamic_rotate %0 by %c239_i32 dim 2 : vector<1x8x256xf32>, i32 -> vector<1x8x256xf32>
    %c8 = arith.constant 8 : index
    %c0_82 = arith.constant 0 : index
    %c0_83 = arith.constant 0 : index
    %166 = vector.load %arg6[%c8, %c0_82, %c0_83] : memref<9x8x256xf32, #tpu.memory_space<vmem>>, vector<1x8x256xf32>
    %167 = vector.shape_cast %166 : vector<1x8x256xf32> to vector<8x256xf32>
    %168 = vector.shape_cast %167 : vector<8x256xf32> to vector<1x8x256xf32>
    %169 = arith.mulf %165, %168 : vector<1x8x256xf32>
    %170 = arith.addf %164, %169 : vector<1x8x256xf32>
    %171 = vector.broadcast %118 : vector<1x8x1xf32> to vector<1x8x256xf32>
    %172 = arith.addf %170, %171 : vector<1x8x256xf32>
    %c0_84 = arith.constant 0 : index
    %c0_85 = arith.constant 0 : index
    %c0_86 = arith.constant 0 : index
    %173 = vector.load %arg8[%c0_84, %c0_85, %c0_86] : memref<1x8x256xf32, #tpu.memory_space<vmem>>, vector<1x8x256xf32>
    tpu.vector_store %arg8[%c0_84, %c0_85, %c0_86], %172 {strides = array<i32>} : memref<1x8x256xf32, #tpu.memory_space<vmem>>, vector<1x8x256xf32>,
    return
  }
  func.func @transform_0(%arg0: i32) -> (i32, i32, i32) {
    %c0_i32 = arith.constant 0 : i32
    %c0_i32_0 = arith.constant 0 : i32
    %c0_i32_1 = arith.constant 0 : i32
    return %arg0, %c0_i32, %c0_i32_0 : i32, i32, i32
  }
  func.func @transform_1(%arg0: i32) -> (i32, i32, i32) {
    %c0_i32 = arith.constant 0 : i32
    %c0_i32_0 = arith.constant 0 : i32
    %c0_i32_1 = arith.constant 0 : i32
    %c0_i32_2 = arith.constant 0 : i32
    return %c0_i32, %c0_i32_0, %c0_i32_1 : i32, i32, i32
  }
  func.func @transform_2(%arg0: i32) -> (i32, i32) {
    %c0_i32 = arith.constant 0 : i32
    %c0_i32_0 = arith.constant 0 : i32
    %c0_i32_1 = arith.constant 0 : i32
    return %c0_i32, %c0_i32_0 : i32, i32
  }
  func.func @transform_3(%arg0: i32) -> (i32, i32, i32) {
    %c0_i32 = arith.constant 0 : i32
    %c0_i32_0 = arith.constant 0 : i32
    %c0_i32_1 = arith.constant 0 : i32
    %c0_i32_2 = arith.constant 0 : i32
    return %c0_i32, %c0_i32_0, %c0_i32_1 : i32, i32, i32
  }
  func.func @transform_4(%arg0: i32) -> (i32, i32) {
    %c0_i32 = arith.constant 0 : i32
    %c0_i32_0 = arith.constant 0 : i32
    %c0_i32_1 = arith.constant 0 : i32
    return %c0_i32, %c0_i32_0 : i32, i32
  }
  func.func @transform_5(%arg0: i32) -> (i32, i32, i32) {
    %c0_i32 = arith.constant 0 : i32
    %c0_i32_0 = arith.constant 0 : i32
    %c0_i32_1 = arith.constant 0 : i32
    %c0_i32_2 = arith.constant 0 : i32
    return %c0_i32, %c0_i32_0, %c0_i32_1 : i32, i32, i32
  }
  func.func @transform_6(%arg0: i32) -> (i32, i32) {
    %c0_i32 = arith.constant 0 : i32
    %c0_i32_0 = arith.constant 0 : i32
    %c0_i32_1 = arith.constant 0 : i32
    return %c0_i32, %c0_i32_0 : i32, i32
  }
  func.func @transform_7(%arg0: i32) -> (i32, i32, i32) {
    %c0_i32 = arith.constant 0 : i32
    %c0_i32_0 = arith.constant 0 : i32
    %c0_i32_1 = arith.constant 0 : i32
    return %arg0, %c0_i32, %c0_i32_0 : i32, i32, i32
  }
}

</mosaic_0001>

<llo_original>
// kernel: tpu_custom_call.1
$region0: #{tpu_custom_call.1}
  #allocation0 [shape = 'u32[]', space=smem, size = 0x4, offset = 0x4, fixed_abs, tag = 'smem constant byte address 0x4 - core index']
  #allocation1 [shape = 'u32[144,128]{1,0:T(1,128)}', space=vmem, size = 0x12000, scoped, tag = 'internal scratch']
  %s0 = inlined_call_operand.vmem [shape: f32[1,8,256], index: 0, kind: input, shape index: {}]
  %s1 = inlined_call_operand.vmem [shape: f32[7,8,1], index: 1, kind: input, shape index: {}]
  %s2 = inlined_call_operand.vmem [shape: f32[8,1], index: 2, kind: input, shape index: {}]
  %s3 = inlined_call_operand.vmem [shape: f32[7,8,1], index: 3, kind: input, shape index: {}]
  %s4 = inlined_call_operand.vmem [shape: f32[8,1], index: 4, kind: input, shape index: {}]
  %s5 = inlined_call_operand.vmem [shape: f32[9,8,256], index: 5, kind: input, shape index: {}]
  %s6 = inlined_call_operand.vmem [shape: f32[8,1], index: 6, kind: input, shape index: {}]
  %s7 = inlined_call_operand.hbm [shape: f32[1,8,256], index: 7, kind: output, shape index: {}]
  %s8 = sld [smem:[#allocation0]]
  $region38: #{tpu_custom_call.1} parent=0
    _
  %s10 = ssub.s32 1, %s8
  %s11 = scalar_select 0, %s10, %s8
  $region1: #{tpu_custom_call.1} parent=0
    #allocation2 [shape = 'u8[8192]{0}', space=vmem, size = 0x2000, scoped, tag = 'output window, operand 0, single buffered']
    #allocation3 [shape = 's32[1]{0}', space=sflag, size = 0x4, scoped, tag = 'scoped memory for tpu_custom_call.1']
    %12 = vsyncpa [#allocation3], 0
    // Predicated region
    $region2: #{tpu_custom_call.1} parent=1 // pred_check
      _
    $region3: #{tpu_custom_call.1} parent=1 // pred_check_branch
      %14 = sbr.rel (0) target = $region5
    $region4: #{tpu_custom_call.1} parent=1 // pred_region
      _
    $region5: #{tpu_custom_call.1} parent=1 // pred_fallthru
      _
    // Predicated region
    $region6: #{tpu_custom_call.1} parent=1 // pred_check
      _
    $region7: #{tpu_custom_call.1} parent=1 // pred_check_branch
      %16 = sbr.rel (0) target = $region9
    $region8: #{tpu_custom_call.1} parent=1 // pred_region
      _
    $region9: #{tpu_custom_call.1} parent=1 // pred_fallthru
      _
    // Predicated region
    $region10: #{tpu_custom_call.1} parent=1 // pred_check
      _
    $region11: #{tpu_custom_call.1} parent=1 // pred_check_branch
      %18 = sbr.rel (0) target = $region13
    $region12: #{tpu_custom_call.1} parent=1 // pred_region
      _
    $region13: #{tpu_custom_call.1} parent=1 // pred_fallthru
      _
    // Predicated region
    $region14: #{tpu_custom_call.1} parent=1 // pred_check
      _
    $region15: #{tpu_custom_call.1} parent=1 // pred_check_branch
      %20 = sbr.rel (0) target = $region17
    $region16: #{tpu_custom_call.1} parent=1 // pred_region
      _
    $region17: #{tpu_custom_call.1} parent=1 // pred_fallthru
      _
    // Predicated region
    $region18: #{tpu_custom_call.1} parent=1 // pred_check
      _
    $region19: #{tpu_custom_call.1} parent=1 // pred_check_branch
      %22 = sbr.rel (0) target = $region21
    $region20: #{tpu_custom_call.1} parent=1 // pred_region
      _
    $region21: #{tpu_custom_call.1} parent=1 // pred_fallthru
      _
    // Predicated region
    $region22: #{tpu_custom_call.1} parent=1 // pred_check
      _
    $region23: #{tpu_custom_call.1} parent=1 // pred_check_branch
      %24 = sbr.rel (0) target = $region25
    $region24: #{tpu_custom_call.1} parent=1 // pred_region
      _
    $region25: #{tpu_custom_call.1} parent=1 // pred_fallthru
      _
    // Predicated region
    $region26: #{tpu_custom_call.1} parent=1 // pred_check
      _
    $region27: #{tpu_custom_call.1} parent=1 // pred_check_branch
      %26 = sbr.rel (0) target = $region29
    $region28: #{tpu_custom_call.1} parent=1 // pred_region
      _
    $region29: #{tpu_custom_call.1} parent=1 // pred_fallthru
      _
    %v27 = vld [vmem:[%s0] sm:$0xff]
    %v28 = vld [vmem:[%s0 + $0x8] sm:$0xff]
    %v29 = vmax.f32 %v27, %v28
    %30 = vmax.xlane.f32.xlu0 %v29
    %v31 = vpop.xlane.xlu0 %30
    %v32 = vld [vmem:[%s2] sm:$0xff]
    %s33 = scalar_lea.vmem %s1, 24
    %v34 = vld [vmem:[%s33] sm:$0xff]
    %v35 = vmul.f32 %v34, %v31
    %v36 = vadd.f32 %v32, %v35
    %v37 = vld [vmem:[%s1] sm:$0xff]
    %v38 = vrot.slane %v31, 3
    %v39 = vmul.f32 %v37, %v38
    %v40 = vadd.f32 %v36, %v39
    %s41 = scalar_lea.vmem %s1, 8
    %v42 = vld [vmem:[%s41] sm:$0xff]
    %v43 = vrot.slane %v31, 2
    %v44 = vmul.f32 %v42, %v43
    %v45 = vadd.f32 %v40, %v44
    %s46 = scalar_lea.vmem %s1, 16
    %v47 = vld [vmem:[%s46] sm:$0xff]
    %v48 = vrot.slane %v31, 1
    %v49 = vmul.f32 %v47, %v48
    %v50 = vadd.f32 %v45, %v49
    %s51 = scalar_lea.vmem %s1, 32
    %v52 = vld [vmem:[%s51] sm:$0xff]
    %v53 = vrot.slane %v31, 7
    %v54 = vmul.f32 %v52, %v53
    %v55 = vadd.f32 %v50, %v54
    %s56 = scalar_lea.vmem %s1, 40
    %v57 = vld [vmem:[%s56] sm:$0xff]
    %v58 = vrot.slane %v31, 6
    %v59 = vmul.f32 %v57, %v58
    %v60 = vadd.f32 %v55, %v59
    %s61 = scalar_lea.vmem %s1, 48
    %v62 = vld [vmem:[%s61] sm:$0xff]
    %v63 = vrot.slane %v31, 5
    %v64 = vmul.f32 %v62, %v63
    %v65 = vadd.f32 %v60, %v64
    %67 = vset.pattern.permute.xlu0 0
    %68 = vperm.xlu0 %67, %v65
    %v69 = vpop.permute.xlu0 %68
    %v71 = vmul.f32 %v69, %v27
    %v72 = vmul.f32 %v69, %v28
    %v73 = vrot.slane %v71, 7
    %v74 = vrot.slane %v72, 7
    %v75 = vadd.f32 %v71, %v73
    %v76 = vadd.f32 %v72, %v74
    %v77 = vrot.slane %v75, 6
    %v78 = vrot.slane %v76, 6
    %v79 = vadd.f32 %v75, %v77
    %v80 = vadd.f32 %v76, %v78
    %v81 = vld [vmem:[%s6] sm:$0xff]
    %83 = vset.pattern.permute.xlu0 0
    %84 = vperm.xlu0 %83, %v81
    %v85 = vpop.permute.xlu0 %84
    %v87 = vmul.f32 %v79, %v85
    %v88 = vmul.f32 %v80, %v85
    %v89 = vrot.slane %v87, 1
    %v90 = vrot.slane %v88, 1
    %v91 = vadd.f32 %v87, %v89
    %v92 = vadd.f32 %v88, %v90
    %v93 = vrot.slane %v91, 2
    %v94 = vrot.slane %v92, 2
    %v95 = vadd.f32 %v91, %v93
    %v96 = vadd.f32 %v92, %v94
    %v97 = vmax.f32 %v95, %v96
    %98 = vmax.xlane.f32.xlu0 %v97
    %v99 = vpop.xlane.xlu0 %98
    %v100 = vsub.f32 %v95, %v99
    %v101 = vsub.f32 %v96, %v99
    %v102 = vmul.f32 %v100, 1.442695
    %v103 = vpow.pop %v102
    %v104 = vmul.f32 %v101, 1.442695
    %v105 = vpow.pop %v104
    %v106 = vadd.f32 %v103, %v105
    %107 = vadd.xlane.f32.xlu0 %v106
    %v108 = vpop.xlane.xlu0 %107
    %v109 = vrcp.pop %v108
    %v110 = vmul.f32 %v108, %v109
    %v111 = vsub.f32 2.0, %v110
    %v112 = vmul.f32 %v109, %v111
    %v113 = vmul.f32 %v27, %v103
    %v114 = vmul.f32 %v28, %v105
    %v115 = vadd.f32 %v113, %v114
    %116 = vadd.xlane.f32.xlu0 %v115
    %v117 = vpop.xlane.xlu0 %116
    %v118 = vmul.f32 %v117, %v112
    %v119 = vld [vmem:[%s4] sm:$0xff]
    %s120 = scalar_lea.vmem %s3, 24
    %v121 = vld [vmem:[%s120] sm:$0xff]
    %v122 = vmul.f32 %v121, %v118
    %v123 = vadd.f32 %v119, %v122
    %v124 = vld [vmem:[%s3] sm:$0xff]
    %v125 = vrot.slane %v118, 3
    %v126 = vmul.f32 %v124, %v125
    %v127 = vadd.f32 %v123, %v126
    %s128 = scalar_lea.vmem %s3, 8
    %v129 = vld [vmem:[%s128] sm:$0xff]
    %v130 = vrot.slane %v118, 2
    %v131 = vmul.f32 %v129, %v130
    %v132 = vadd.f32 %v127, %v131
    %s133 = scalar_lea.vmem %s3, 16
    %v134 = vld [vmem:[%s133] sm:$0xff]
    %v135 = vrot.slane %v118, 1
    %v136 = vmul.f32 %v134, %v135
    %v137 = vadd.f32 %v132, %v136
    %s138 = scalar_lea.vmem %s3, 32
    %v139 = vld [vmem:[%s138] sm:$0xff]
    %v140 = vrot.slane %v118, 7
    %v141 = vmul.f32 %v139, %v140
    %v142 = vadd.f32 %v137, %v141
    %s143 = scalar_lea.vmem %s3, 40
    %v144 = vld [vmem:[%s143] sm:$0xff]
    %v145 = vrot.slane %v118, 6
    %v146 = vmul.f32 %v144, %v145
    %v147 = vadd.f32 %v142, %v146
    %s148 = scalar_lea.vmem %s3, 48
    %v149 = vld [vmem:[%s148] sm:$0xff]
    %v150 = vrot.slane %v118, 5
    %v151 = vmul.f32 %v149, %v150
    %v152 = vadd.f32 %v147, %v151
    %s153 = scalar_lea.vmem %s5, 64
    %v154 = vld [vmem:[%s153] sm:$0xff]
    %v155 = vld [vmem:[%s153 + $0x8] sm:$0xff]
    %v156 = vmul.f32 %v27, %v154
    %v157 = vmul.f32 %v28, %v155
    %158 = vrot.lane.b32.xlu0 %v27, 17
    %v159 = vpop.permute.xlu0 %158
    %160 = vrot.lane.b32.xlu0 %v28, 17
    %v161 = vpop.permute.xlu0 %160
    %v162 = vlaneseq
    %v163 = vand.u32 %v162, 127
    %vm164 = vcmp.lt.s32.totalorder %v163, 17
    %v165 = vsel %vm164, %v159, %v161
    %v166 = vsel %vm164, %v161, %v159
    %v167 = vld [vmem:[%s5] sm:$0xff]
    %v168 = vld [vmem:[%s5 + $0x8] sm:$0xff]
    %v169 = vmul.f32 %v166, %v167
    %v170 = vmul.f32 %v165, %v168
    %v171 = vadd.f32 %v156, %v169
    %v172 = vadd.f32 %v157, %v170
    %173 = vrot.lane.b32.xlu0 %v27, 16
    %v174 = vpop.permute.xlu0 %173
    %175 = vrot.lane.b32.xlu0 %v28, 16
    %v176 = vpop.permute.xlu0 %175
    %vm177 = vcmp.lt.s32.totalorder %v163, 16
    %v178 = vsel %vm177, %v174, %v176
    %v179 = vsel %vm177, %v176, %v174
    %s180 = scalar_lea.vmem %s5, 16
    %v181 = vld [vmem:[%s180] sm:$0xff]
    %v182 = vld [vmem:[%s180 + $0x8] sm:$0xff]
    %v183 = vmul.f32 %v179, %v181
    %v184 = vmul.f32 %v178, %v182
    %v185 = vadd.f32 %v171, %v183
    %v186 = vadd.f32 %v172, %v184
    %187 = vrot.lane.b32.xlu0 %v27, 15
    %v188 = vpop.permute.xlu0 %187
    %189 = vrot.lane.b32.xlu0 %v28, 15
    %v190 = vpop.permute.xlu0 %189
    %vm191 = vcmp.lt.s32.totalorder %v163, 15
    %v192 = vsel %vm191, %v188, %v190
    %v193 = vsel %vm191, %v190, %v188
    %s194 = scalar_lea.vmem %s5, 32
    %v195 = vld [vmem:[%s194] sm:$0xff]
    %v196 = vld [vmem:[%s194 + $0x8] sm:$0xff]
    %v197 = vmul.f32 %v193, %v195
    %v198 = vmul.f32 %v192, %v196
    %v199 = vadd.f32 %v185, %v197
    %v200 = vadd.f32 %v186, %v198
    %201 = vrot.lane.b32.xlu0 %v27, 1
    %v202 = vpop.permute.xlu0 %201
    %203 = vrot.lane.b32.xlu0 %v28, 1
    %v204 = vpop.permute.xlu0 %203
    %vm205 = vcmp.lt.s32.totalorder %v163, 1
    %v206 = vsel %vm205, %v202, %v204
    %v207 = vsel %vm205, %v204, %v202
    %s208 = scalar_lea.vmem %s5, 48
    %v209 = vld [vmem:[%s208] sm:$0xff]
    %v210 = vld [vmem:[%s208 + $0x8] sm:$0xff]
    %v211 = vmul.f32 %v207, %v209
    %v212 = vmul.f32 %v206, %v210
    %v213 = vadd.f32 %v199, %v211
    %v214 = vadd.f32 %v200, %v212
    %215 = vrot.lane.b32.xlu0 %v27, 127
    %v216 = vpop.permute.xlu0 %215
    %217 = vrot.lane.b32.xlu0 %v28, 127
    %v218 = vpop.permute.xlu0 %217
    %vm219 = vcmp.lt.s32.totalorder %v163, 127
    %v220 = vsel %vm219, %v216, %v218
    %v221 = vsel %vm219, %v218, %v216
    %s222 = scalar_lea.vmem %s5, 80
    %v223 = vld [vmem:[%s222] sm:$0xff]
    %v224 = vld [vmem:[%s222 + $0x8] sm:$0xff]
    %v225 = vmul.f32 %v220, %v223
    %v226 = vmul.f32 %v221, %v224
    %v227 = vadd.f32 %v213, %v225
    %v228 = vadd.f32 %v214, %v226
    %229 = vrot.lane.b32.xlu0 %v27, 113
    %v230 = vpop.permute.xlu0 %229
    %231 = vrot.lane.b32.xlu0 %v28, 113
    %v232 = vpop.permute.xlu0 %231
    %vm233 = vcmp.lt.s32.totalorder %v163, 113
    %v234 = vsel %vm233, %v230, %v232
    %v235 = vsel %vm233, %v232, %v230
    %s236 = scalar_lea.vmem %s5, 96
    %v237 = vld [vmem:[%s236] sm:$0xff]
    %v238 = vld [vmem:[%s236 + $0x8] sm:$0xff]
    %v239 = vmul.f32 %v234, %v237
    %v240 = vmul.f32 %v235, %v238
    %v241 = vadd.f32 %v227, %v239
    %v242 = vadd.f32 %v228, %v240
    %243 = vrot.lane.b32.xlu0 %v27, 112
    %v244 = vpop.permute.xlu0 %243
    %245 = vrot.lane.b32.xlu0 %v28, 112
    %v246 = vpop.permute.xlu0 %245
    %vm247 = vcmp.lt.s32.totalorder %v163, 112
    %v248 = vsel %vm247, %v244, %v246
    %v249 = vsel %vm247, %v246, %v244
    %s250 = scalar_lea.vmem %s5, 112
    %v251 = vld [vmem:[%s250] sm:$0xff]
    %v252 = vld [vmem:[%s250 + $0x8] sm:$0xff]
    %v253 = vmul.f32 %v248, %v251
    %v254 = vmul.f32 %v249, %v252
    %v255 = vadd.f32 %v241, %v253
    %v256 = vadd.f32 %v242, %v254
    %257 = vrot.lane.b32.xlu0 %v27, 111
    %v258 = vpop.permute.xlu0 %257
    %259 = vrot.lane.b32.xlu0 %v28, 111
    %v260 = vpop.permute.xlu0 %259
    %vm261 = vcmp.lt.s32.totalorder %v163, 111
    %v262 = vsel %vm261, %v258, %v260
    %v263 = vsel %vm261, %v260, %v258
    %s264 = scalar_lea.vmem %s5, 128
    %v265 = vld [vmem:[%s264] sm:$0xff]
    %v266 = vld [vmem:[%s264 + $0x8] sm:$0xff]
    %v267 = vmul.f32 %v262, %v265
    %v268 = vmul.f32 %v263, %v266
    %v269 = vadd.f32 %v255, %v267
    %v270 = vadd.f32 %v256, %v268
    %272 = vset.pattern.permute.xlu0 0
    %273 = vperm.xlu0 %272, %v152
    %v274 = vpop.permute.xlu0 %273
    %v276 = vadd.f32 %v269, %v274
    %v277 = vadd.f32 %v270, %v274
    %278 = vst [vmem:[#allocation2] sm:$0xff] %v276
    %279 = vst [vmem:[#allocation2 + $0x8] sm:$0xff] %v277
    // Predicated region
    $region30: #{tpu_custom_call.1} parent=1 // pred_check
      _
    $region31: #{tpu_custom_call.1} parent=1 // pred_check_branch
      %281 = sbr.rel (0) target = $region33
    $region32: #{tpu_custom_call.1} parent=1 // pred_region
      %s283 = ssub.s32 256, 256
      %284 = vsyncadd [#allocation3], %s283
      %s286 = sshll.u32 [#allocation2], 4
      %s287 = int_to_ptr.vmem [resolvable:$true] %s286
      %289 = dma.vmem_to_hbm [thread:$0]  %s287, 256, %s7, [#allocation3]
    $region33: #{tpu_custom_call.1} parent=1 // pred_fallthru
      _
    // Predicated region
    $region34: #{tpu_custom_call.1} parent=1 // pred_check
      _
    $region35: #{tpu_custom_call.1} parent=1 // pred_check_branch
      %291 = sbr.rel (0) target = $region37
    $region36: #{tpu_custom_call.1} parent=1 // pred_region
      %292 = dma.done [#allocation3], 256
    $region37: #{tpu_custom_call.1} parent=1 // pred_fallthru
      _
    %293 = vsyncpa [#allocation3], 1

</llo_original>
